<compile_context>
chip_gen: v7x
topology: tpu7x:2x2x1
jax: 0.10.0
libtpu: 0.0.40
codegen_flags: <defaults>
</compile_context>

<pallas_src>
from functools import partial

import jax
import jax.numpy as jnp
from jax.experimental import pallas as pl
from jax.experimental.pallas import tpu as pltpu
import numpy as np

LANE, SUBLANE = 128, 8


def _round_up(n, m):
    return ((n + m - 1) // m) * m


def rnn_kernel(x_ref, w_in_ref, b_in_ref, w_hh_ref, w_fc_ref, b_fc_ref,
               out_ref, p_ref):
    T, Bp, Ip = x_ref.shape
    Hp = w_hh_ref.shape[1]

    # ---- Hoisted input projection: one big MXU matmul over all T steps,
    # recurrent bias (b_ih + b_hh) folded in.  Off the serial chain. ----
    x_all = x_ref[...].reshape(T * Bp, Ip)                      # bf16
    p_all = (jnp.dot(x_all, w_in_ref[...],
                     preferred_element_type=jnp.float32)        # f32 accumulate
             + b_in_ref[...])
    p_ref[...] = p_all.reshape(T, Bp, Hp)

    # Loop-invariant recurrent weight (bf16), hoisted out of the time loop.
    w_hh = w_hh_ref[...]

    def step(t, h):
        # Serial critical path: (8,128)x(128,128) bf16 matmul -> add -> tanh.
        z = p_ref[t] + jnp.dot(h.astype(jnp.bfloat16), w_hh,
                               preferred_element_type=jnp.float32)
        return jnp.tanh(z)                                      # f32 elementwise

    h0 = jnp.zeros((Bp, Hp), jnp.float32)
    h_final = jax.lax.fori_loop(0, T, step, h0, unroll=min(T, 8))

    # FC head on the last hidden state, inside the same invocation.
    logits = (jnp.dot(h_final.astype(jnp.bfloat16), w_fc_ref[...],
                      preferred_element_type=jnp.float32)
              + b_fc_ref[...])
    out_ref[...] = logits.astype(out_ref.dtype)


def pack_params(params):
    """One-time padding/packing of the weights into MXU-friendly layouts.

    Done once at init (NOT per forward call) per the perf review.  Matmul
    operands are stored as bf16 (f32 accumulation happens in the kernel);
    biases stay f32.
    """
    H, I = params["w_ih"].shape
    C = params["w_fc"].shape[0]
    Ip, Hp, Cp = _round_up(I, LANE), _round_up(H, LANE), _round_up(C, LANE)

    w_in = (jnp.zeros((Ip, Hp), jnp.float32)
            .at[:I, :H].set(params["w_ih"].T).astype(jnp.bfloat16))
    b_in = (jnp.zeros((1, Hp), jnp.float32)
            .at[0, :H].set(params["b_ih"] + params["b_hh"]))
    w_hh = (jnp.zeros((Hp, Hp), jnp.float32)
            .at[:H, :H].set(params["w_hh"].T).astype(jnp.bfloat16))
    w_fc = (jnp.zeros((Hp, Cp), jnp.float32)
            .at[:H, :C].set(params["w_fc"].T).astype(jnp.bfloat16))
    b_fc = jnp.zeros((1, Cp), jnp.float32).at[0, :C].set(params["b_fc"])
    return {"w_in": w_in, "b_in": b_in, "w_hh": w_hh, "w_fc": w_fc, "b_fc": b_fc}


@partial(jax.jit, static_argnames=("num_classes",))
def simple_rnn_forward(x, packed, *, num_classes):
    """x: (B, T, I) float32, batch_first like the PyTorch module."""
    B, T, I = x.shape
    Ip, Hp = packed["w_in"].shape
    Cp = packed["w_fc"].shape[1]
    Bp = _round_up(B, SUBLANE)

    # Time-major, padded, bf16 input: x_t occupies lanes [0:I] of each (Bp, Ip)
    # slab; padding lanes/rows are exactly zero.
    x_tbi = jnp.transpose(x, (1, 0, 2)).astype(jnp.float32)          # (T, B, I)
    x_pad = (jnp.zeros((T, Bp, Ip), jnp.float32)
             .at[:, :B, :I].set(x_tbi).astype(jnp.bfloat16))

    out_pad = pl.pallas_call(
        rnn_kernel,
        out_shape=jax.ShapeDtypeStruct((Bp, Cp), jnp.float32),
        # No grid: the whole problem (a few hundred KiB) is one VMEM-resident call.
        in_specs=[pl.BlockSpec(memory_space=pltpu.MemorySpace.VMEM)] * 6,
        out_specs=pl.BlockSpec(memory_space=pltpu.MemorySpace.VMEM),
        scratch_shapes=[pltpu.VMEM((T, Bp, Hp), jnp.float32)],        # P[t]
    )(x_pad, packed["w_in"], packed["b_in"], packed["w_hh"],
      packed["w_fc"], packed["b_fc"])

    return out_pad[:B, :num_classes]


def ref_forward(x, params):
    """Pure-JAX f32 reference mirroring torch.nn.RNN(batch_first=True) + Linear."""
    B = x.shape[0]
    H = params["w_hh"].shape[0]

    def step(h, x_t):
        h_new = jnp.tanh(x_t @ params["w_ih"].T + params["b_ih"]
                         + h @ params["w_hh"].T + params["b_hh"])
        return h_new, None

    h0 = jnp.zeros((B, H), jnp.float32)
    hT, _ = jax.lax.scan(step, h0, jnp.transpose(x, (1, 0, 2)))
    return hT @ params["w_fc"].T + params["b_fc"]


def ref_forward_matched(x, params):
    """Reference with the SAME numerics as the kernel: bf16 matmul operands,
    f32 accumulation, f32 tanh/bias.  Used for the tight correctness check."""
    B = x.shape[0]
    H = params["w_hh"].shape[0]
    bf = jnp.bfloat16

    p = (jnp.einsum("tbi,ih->tbh",
                    jnp.transpose(x, (1, 0, 2)).astype(bf),
                    params["w_ih"].T.astype(bf),
                    preferred_element_type=jnp.float32)
         + (params["b_ih"] + params["b_hh"]))

    w_hh_t = params["w_hh"].T.astype(bf)

    def step(h, p_t):
        z = p_t + jnp.dot(h.astype(bf), w_hh_t,
                          preferred_element_type=jnp.float32)
        return jnp.tanh(z), None

    h0 = jnp.zeros((B, H), jnp.float32)
    hT, _ = jax.lax.scan(step, h0, p)
    return (jnp.dot(hT.astype(bf), params["w_fc"].T.astype(bf),
                    preferred_element_type=jnp.float32)
            + params["b_fc"])


def init_params(key, input_size, hidden_size, num_classes):
    ks = jax.random.split(key, 6)
    k_rnn = 1.0 / np.sqrt(hidden_size)
    k_fc = 1.0 / np.sqrt(hidden_size)
    return {
        "w_ih": jax.random.uniform(ks[0], (hidden_size, input_size),
                                   jnp.float32, -k_rnn, k_rnn),
        "w_hh": jax.random.uniform(ks[1], (hidden_size, hidden_size),
                                   jnp.float32, -k_rnn, k_rnn),
        "b_ih": jax.random.uniform(ks[2], (hidden_size,),
                                   jnp.float32, -k_rnn, k_rnn),
        "b_hh": jax.random.uniform(ks[3], (hidden_size,),
                                   jnp.float32, -k_rnn, k_rnn),
        "w_fc": jax.random.uniform(ks[4], (num_classes, hidden_size),
                                   jnp.float32, -k_fc, k_fc),
        "b_fc": jax.random.uniform(ks[5], (num_classes,),
                                   jnp.float32, -k_fc, k_fc),
    }


if __name__ == "__main__":
    B, T, INPUT, HIDDEN, NUM_CLASSES = 2, 8, 64, 32, 10

    key = jax.random.PRNGKey(0)
    kx, kp = jax.random.split(key)
    x = jax.random.normal(kx, (B, T, INPUT), jnp.float32)
    params = init_params(kp, INPUT, HIDDEN, NUM_CLASSES)
    packed = pack_params(params)          # one-time packing, outside the hot path

    out = jax.block_until_ready(
        simple_rnn_forward(x, packed, num_classes=NUM_CLASSES))
    assert out.shape == (B, NUM_CLASSES)

    # Tight check against a reference with matching (bf16-operand) numerics.
    ref_bf16 = jax.block_until_ready(ref_forward_matched(x, params))
    np.testing.assert_allclose(np.asarray(out), np.asarray(ref_bf16),
                               rtol=2e-3, atol=2e-3)

    # Loose semantic sanity check against the strict f32 module reference
    # (bf16 matmul operands make a 1e-5 match unattainable by construction).
    ref_f32 = jax.block_until_ready(ref_forward(x, params))
    np.testing.assert_allclose(np.asarray(out), np.asarray(ref_f32),
                               rtol=1e-1, atol=1e-1)

    print("KERNEL_OK")
</pallas_src>

<mosaic_0001>
module attributes {stable_mosaic.version = 11 : i64} {
  func.func @rnn_kernel(%arg0: memref<8x8x128xbf16, #tpu.memory_space<vmem>>, %arg1: memref<128x128xbf16, #tpu.memory_space<vmem>>, %arg2: memref<1x128xf32, #tpu.memory_space<vmem>>, %arg3: memref<128x128xbf16, #tpu.memory_space<vmem>>, %arg4: memref<128x128xbf16, #tpu.memory_space<vmem>>, %arg5: memref<1x128xf32, #tpu.memory_space<vmem>>, %arg6: memref<8x128xf32, #tpu.memory_space<vmem>>, %arg7: memref<8x8x128xf32, #tpu.memory_space<vmem>>) attributes {dimension_semantics = [], scalar_prefetch = 0 : i64, scratch_operands = 1 : i64, tpu.core_type = #tpu.core_type<tc>} {
    %c0 = arith.constant 0 : index
    %c0_0 = arith.constant 0 : index
    %c0_1 = arith.constant 0 : index
    %0 = vector.load %arg0[%c0, %c0_0, %c0_1] : memref<8x8x128xbf16, #tpu.memory_space<vmem>>, vector<8x8x128xbf16>
    %1 = vector.shape_cast %0 : vector<8x8x128xbf16> to vector<64x128xbf16>
    %c0_2 = arith.constant 0 : index
    %c0_3 = arith.constant 0 : index
    %2 = vector.load %arg1[%c0_2, %c0_3] : memref<128x128xbf16, #tpu.memory_space<vmem>>, vector<128x128xbf16>
    %cst = arith.constant dense<0.000000e+00> : vector<64x128xf32>
    %3 = tpu.matmul %1, %2, %cst {dimension_numbers = #tpu.dot_dimension_numbers<[1], [0], [0], [1], [0, 0, 1, 1], [], []>} : vector<64x128xbf16>, vector<128x128xbf16>, vector<64x128xf32> -> vector<64x128xf32>
    %c0_4 = arith.constant 0 : index
    %c0_5 = arith.constant 0 : index
    %4 = vector.load %arg2[%c0_4, %c0_5] : memref<1x128xf32, #tpu.memory_space<vmem>>, vector<1x128xf32>
    %5 = vector.broadcast %4 : vector<1x128xf32> to vector<64x128xf32>
    %6 = arith.addf %3, %5 : vector<64x128xf32>
    %7 = vector.shape_cast %6 : vector<64x128xf32> to vector<8x8x128xf32>
    %c0_6 = arith.constant 0 : index
    %c0_7 = arith.constant 0 : index
    %c0_8 = arith.constant 0 : index
    %8 = vector.load %arg7[%c0_6, %c0_7, %c0_8] : memref<8x8x128xf32, #tpu.memory_space<vmem>>, vector<8x8x128xf32>
    tpu.vector_store %arg7[%c0_6, %c0_7, %c0_8], %7 {strides = array<i32>} : memref<8x8x128xf32, #tpu.memory_space<vmem>>, vector<8x8x128xf32>,
    %c0_9 = arith.constant 0 : index
    %c0_10 = arith.constant 0 : index
    %9 = vector.load %arg3[%c0_9, %c0_10] : memref<128x128xbf16, #tpu.memory_space<vmem>>, vector<128x128xbf16>
    %cst_11 = arith.constant 0.000000e+00 : f32
    %10 = vector.broadcast %cst_11 : f32 to vector<8x128xf32>
    %c0_i32 = arith.constant 0 : i32
    %11 = arith.index_cast %c0_i32 : i32 to index
    %c0_12 = arith.constant 0 : index
    %c0_13 = arith.constant 0 : index
    %12 = vector.load %arg7[%11, %c0_12, %c0_13] : memref<8x8x128xf32, #tpu.memory_space<vmem>>, vector<1x8x128xf32>
    %13 = vector.shape_cast %12 : vector<1x8x128xf32> to vector<8x128xf32>
    %14 = arith.truncf %10 : vector<8x128xf32> to vector<8x128xbf16>
    %cst_14 = arith.constant dense<0.000000e+00> : vector<8x128xf32>
    %15 = tpu.matmul %14, %9, %cst_14 {dimension_numbers = #tpu.dot_dimension_numbers<[1], [0], [0], [1], [0, 0, 1, 1], [], []>} : vector<8x128xbf16>, vector<128x128xbf16>, vector<8x128xf32> -> vector<8x128xf32>
    %16 = arith.addf %13, %15 : vector<8x128xf32>
    %17 = math.tanh %16 : vector<8x128xf32>
    %c1_i32 = arith.constant 1 : i32
    %18 = arith.index_cast %c1_i32 : i32 to index
    %c0_15 = arith.constant 0 : index
    %c0_16 = arith.constant 0 : index
    %19 = vector.load %arg7[%18, %c0_15, %c0_16] : memref<8x8x128xf32, #tpu.memory_space<vmem>>, vector<1x8x128xf32>
    %20 = vector.shape_cast %19 : vector<1x8x128xf32> to vector<8x128xf32>
    %21 = arith.truncf %17 : vector<8x128xf32> to vector<8x128xbf16>
    %cst_17 = arith.constant dense<0.000000e+00> : vector<8x128xf32>
    %22 = tpu.matmul %21, %9, %cst_17 {dimension_numbers = #tpu.dot_dimension_numbers<[1], [0], [0], [1], [0, 0, 1, 1], [], []>} : vector<8x128xbf16>, vector<128x128xbf16>, vector<8x128xf32> -> vector<8x128xf32>
    %23 = arith.addf %20, %22 : vector<8x128xf32>
    %24 = math.tanh %23 : vector<8x128xf32>
    %c2_i32 = arith.constant 2 : i32
    %25 = arith.index_cast %c2_i32 : i32 to index
    %c0_18 = arith.constant 0 : index
    %c0_19 = arith.constant 0 : index
    %26 = vector.load %arg7[%25, %c0_18, %c0_19] : memref<8x8x128xf32, #tpu.memory_space<vmem>>, vector<1x8x128xf32>
    %27 = vector.shape_cast %26 : vector<1x8x128xf32> to vector<8x128xf32>
    %28 = arith.truncf %24 : vector<8x128xf32> to vector<8x128xbf16>
    %cst_20 = arith.constant dense<0.000000e+00> : vector<8x128xf32>
    %29 = tpu.matmul %28, %9, %cst_20 {dimension_numbers = #tpu.dot_dimension_numbers<[1], [0], [0], [1], [0, 0, 1, 1], [], []>} : vector<8x128xbf16>, vector<128x128xbf16>, vector<8x128xf32> -> vector<8x128xf32>
    %30 = arith.addf %27, %29 : vector<8x128xf32>
    %31 = math.tanh %30 : vector<8x128xf32>
    %c3_i32 = arith.constant 3 : i32
    %32 = arith.index_cast %c3_i32 : i32 to index
    %c0_21 = arith.constant 0 : index
    %c0_22 = arith.constant 0 : index
    %33 = vector.load %arg7[%32, %c0_21, %c0_22] : memref<8x8x128xf32, #tpu.memory_space<vmem>>, vector<1x8x128xf32>
    %34 = vector.shape_cast %33 : vector<1x8x128xf32> to vector<8x128xf32>
    %35 = arith.truncf %31 : vector<8x128xf32> to vector<8x128xbf16>
    %cst_23 = arith.constant dense<0.000000e+00> : vector<8x128xf32>
    %36 = tpu.matmul %35, %9, %cst_23 {dimension_numbers = #tpu.dot_dimension_numbers<[1], [0], [0], [1], [0, 0, 1, 1], [], []>} : vector<8x128xbf16>, vector<128x128xbf16>, vector<8x128xf32> -> vector<8x128xf32>
    %37 = arith.addf %34, %36 : vector<8x128xf32>
    %38 = math.tanh %37 : vector<8x128xf32>
    %c4_i32 = arith.constant 4 : i32
    %39 = arith.index_cast %c4_i32 : i32 to index
    %c0_24 = arith.constant 0 : index
    %c0_25 = arith.constant 0 : index
    %40 = vector.load %arg7[%39, %c0_24, %c0_25] : memref<8x8x128xf32, #tpu.memory_space<vmem>>, vector<1x8x128xf32>
    %41 = vector.shape_cast %40 : vector<1x8x128xf32> to vector<8x128xf32>
    %42 = arith.truncf %38 : vector<8x128xf32> to vector<8x128xbf16>
    %cst_26 = arith.constant dense<0.000000e+00> : vector<8x128xf32>
    %43 = tpu.matmul %42, %9, %cst_26 {dimension_numbers = #tpu.dot_dimension_numbers<[1], [0], [0], [1], [0, 0, 1, 1], [], []>} : vector<8x128xbf16>, vector<128x128xbf16>, vector<8x128xf32> -> vector<8x128xf32>
    %44 = arith.addf %41, %43 : vector<8x128xf32>
    %45 = math.tanh %44 : vector<8x128xf32>
    %c5_i32 = arith.constant 5 : i32
    %46 = arith.index_cast %c5_i32 : i32 to index
    %c0_27 = arith.constant 0 : index
    %c0_28 = arith.constant 0 : index
    %47 = vector.load %arg7[%46, %c0_27, %c0_28] : memref<8x8x128xf32, #tpu.memory_space<vmem>>, vector<1x8x128xf32>
    %48 = vector.shape_cast %47 : vector<1x8x128xf32> to vector<8x128xf32>
    %49 = arith.truncf %45 : vector<8x128xf32> to vector<8x128xbf16>
    %cst_29 = arith.constant dense<0.000000e+00> : vector<8x128xf32>
    %50 = tpu.matmul %49, %9, %cst_29 {dimension_numbers = #tpu.dot_dimension_numbers<[1], [0], [0], [1], [0, 0, 1, 1], [], []>} : vector<8x128xbf16>, vector<128x128xbf16>, vector<8x128xf32> -> vector<8x128xf32>
    %51 = arith.addf %48, %50 : vector<8x128xf32>
    %52 = math.tanh %51 : vector<8x128xf32>
    %c6_i32 = arith.constant 6 : i32
    %53 = arith.index_cast %c6_i32 : i32 to index
    %c0_30 = arith.constant 0 : index
    %c0_31 = arith.constant 0 : index
    %54 = vector.load %arg7[%53, %c0_30, %c0_31] : memref<8x8x128xf32, #tpu.memory_space<vmem>>, vector<1x8x128xf32>
    %55 = vector.shape_cast %54 : vector<1x8x128xf32> to vector<8x128xf32>
    %56 = arith.truncf %52 : vector<8x128xf32> to vector<8x128xbf16>
    %cst_32 = arith.constant dense<0.000000e+00> : vector<8x128xf32>
    %57 = tpu.matmul %56, %9, %cst_32 {dimension_numbers = #tpu.dot_dimension_numbers<[1], [0], [0], [1], [0, 0, 1, 1], [], []>} : vector<8x128xbf16>, vector<128x128xbf16>, vector<8x128xf32> -> vector<8x128xf32>
    %58 = arith.addf %55, %57 : vector<8x128xf32>
    %59 = math.tanh %58 : vector<8x128xf32>
    %c7_i32 = arith.constant 7 : i32
    %60 = arith.index_cast %c7_i32 : i32 to index
    %c0_33 = arith.constant 0 : index
    %c0_34 = arith.constant 0 : index
    %61 = vector.load %arg7[%60, %c0_33, %c0_34] : memref<8x8x128xf32, #tpu.memory_space<vmem>>, vector<1x8x128xf32>
    %62 = vector.shape_cast %61 : vector<1x8x128xf32> to vector<8x128xf32>
    %63 = arith.truncf %59 : vector<8x128xf32> to vector<8x128xbf16>
    %cst_35 = arith.constant dense<0.000000e+00> : vector<8x128xf32>
    %64 = tpu.matmul %63, %9, %cst_35 {dimension_numbers = #tpu.dot_dimension_numbers<[1], [0], [0], [1], [0, 0, 1, 1], [], []>} : vector<8x128xbf16>, vector<128x128xbf16>, vector<8x128xf32> -> vector<8x128xf32>
    %65 = arith.addf %62, %64 : vector<8x128xf32>
    %66 = math.tanh %65 : vector<8x128xf32>
    %c8_i32 = arith.constant 8 : i32
    %67 = arith.truncf %66 : vector<8x128xf32> to vector<8x128xbf16>
    %c0_36 = arith.constant 0 : index
    %c0_37 = arith.constant 0 : index
    %68 = vector.load %arg4[%c0_36, %c0_37] : memref<128x128xbf16, #tpu.memory_space<vmem>>, vector<128x128xbf16>
    %cst_38 = arith.constant dense<0.000000e+00> : vector<8x128xf32>
    %69 = tpu.matmul %67, %68, %cst_38 {dimension_numbers = #tpu.dot_dimension_numbers<[1], [0], [0], [1], [0, 0, 1, 1], [], []>} : vector<8x128xbf16>, vector<128x128xbf16>, vector<8x128xf32> -> vector<8x128xf32>
    %c0_39 = arith.constant 0 : index
    %c0_40 = arith.constant 0 : index
    %70 = vector.load %arg5[%c0_39, %c0_40] : memref<1x128xf32, #tpu.memory_space<vmem>>, vector<1x128xf32>
    %71 = vector.broadcast %70 : vector<1x128xf32> to vector<8x128xf32>
    %72 = arith.addf %69, %71 : vector<8x128xf32>
    %c0_41 = arith.constant 0 : index
    %c0_42 = arith.constant 0 : index
    %73 = vector.load %arg6[%c0_41, %c0_42] : memref<8x128xf32, #tpu.memory_space<vmem>>, vector<8x128xf32>
    tpu.vector_store %arg6[%c0_41, %c0_42], %72 {strides = array<i32>} : memref<8x128xf32, #tpu.memory_space<vmem>>, vector<8x128xf32>,
    return
  }
}

</mosaic_0001>

<llo_original>
// kernel: simple_rnn_forward.1
$region0: #{simple_rnn_forward.1}
  #allocation0 [shape = 'u32[]', space=smem, size = 0x4, offset = 0x4, fixed_abs, tag = 'smem constant byte address 0x4 - core index']
  #allocation1 [shape = 'u32[144,128]{1,0:T(1,128)}', space=vmem, size = 0x12000, scoped, tag = 'internal scratch']
  #allocation2 [shape = 'f32[8,8,128]{2,1,0:T(8,128)}', space=vmem, size = 0x8000, scoped, tag = 'scratch operand']
  %s0 = inlined_call_operand.vmem [shape: bf16[8,8,128], index: 0, kind: input, shape index: {}]
  %s1 = inlined_call_operand.vmem [shape: bf16[128,128], index: 1, kind: input, shape index: {}]
  %s2 = inlined_call_operand.vmem [shape: f32[1,128], index: 2, kind: input, shape index: {}]
  %s3 = inlined_call_operand.hbm [shape: bf16[128,128], index: 3, kind: input, shape index: {}]
  %s4 = inlined_call_operand.hbm [shape: bf16[128,128], index: 4, kind: input, shape index: {}]
  %s5 = inlined_call_operand.vmem [shape: f32[1,128], index: 5, kind: input, shape index: {}]
  %s6 = inlined_call_operand.vmem [shape: f32[8,128], index: 6, kind: output, shape index: {}]
  %s7 = sld [smem:[#allocation0]]
  $region42: #{simple_rnn_forward.1} parent=0
    _
  %s9 = ssub.s32 1, %s7
  %s10 = scalar_select 0, %s9, %s7
  $region1: #{simple_rnn_forward.1} parent=0
    #allocation3 [shape = 'u8[32768]{0}', space=vmem, size = 0x8000, scoped, tag = 'input window, operand 3, single buffered']
    #allocation4 [shape = 's32[1]{0}', space=sflag, size = 0x4, scoped, tag = 'scoped memory for simple_rnn_forward.1']
    #allocation5 [shape = 'u8[32768]{0}', space=vmem, size = 0x8000, scoped, tag = 'input window, operand 4, single buffered']
    #allocation6 [shape = 's32[1]{0}', space=sflag, size = 0x4, scoped, tag = 'scoped memory for simple_rnn_forward.1']
    %11 = vsyncpa [#allocation4], 0
    %12 = vsyncpa [#allocation6], 0
    // Predicated region
    $region2: #{simple_rnn_forward.1} parent=1 // pred_check
      _
    $region3: #{simple_rnn_forward.1} parent=1 // pred_check_branch
      %14 = sbr.rel (0) target = $region5
    $region4: #{simple_rnn_forward.1} parent=1 // pred_region
      _
    $region5: #{simple_rnn_forward.1} parent=1 // pred_fallthru
      _
    // Predicated region
    $region6: #{simple_rnn_forward.1} parent=1 // pred_check
      _
    $region7: #{simple_rnn_forward.1} parent=1 // pred_check_branch
      %16 = sbr.rel (0) target = $region9
    $region8: #{simple_rnn_forward.1} parent=1 // pred_region
      _
    $region9: #{simple_rnn_forward.1} parent=1 // pred_fallthru
      _
    // Predicated region
    $region10: #{simple_rnn_forward.1} parent=1 // pred_check
      _
    $region11: #{simple_rnn_forward.1} parent=1 // pred_check_branch
      %18 = sbr.rel (0) target = $region13
    $region12: #{simple_rnn_forward.1} parent=1 // pred_region
      _
    $region13: #{simple_rnn_forward.1} parent=1 // pred_fallthru
      _
    // Predicated region
    $region14: #{simple_rnn_forward.1} parent=1 // pred_check
      _
    $region15: #{simple_rnn_forward.1} parent=1 // pred_check_branch
      %20 = sbr.rel (0) target = $region17
    $region16: #{simple_rnn_forward.1} parent=1 // pred_region
      %s22 = ssub.s32 1024, 1024
      %23 = vsyncadd [#allocation4], %s22
      %s24 = sshll.u32 [#allocation3], 4
      %s25 = int_to_ptr.vmem [resolvable:$true] %s24
      %30 = dma.hbm_to_vmem [thread:$0]  %s3, 1024, %s25, [#allocation4], 64, 64, 4
    $region17: #{simple_rnn_forward.1} parent=1 // pred_fallthru
      _
    // Predicated region
    $region18: #{simple_rnn_forward.1} parent=1 // pred_check
      _
    $region19: #{simple_rnn_forward.1} parent=1 // pred_check_branch
      %32 = sbr.rel (0) target = $region21
    $region20: #{simple_rnn_forward.1} parent=1 // pred_region
      %s34 = ssub.s32 1024, 1024
      %35 = vsyncadd [#allocation6], %s34
      %s36 = sshll.u32 [#allocation5], 4
      %s37 = int_to_ptr.vmem [resolvable:$true] %s36
      %42 = dma.hbm_to_vmem [thread:$0]  %s4, 1024, %s37, [#allocation6], 64, 64, 4
    $region21: #{simple_rnn_forward.1} parent=1 // pred_fallthru
      _
    // Predicated region
    $region22: #{simple_rnn_forward.1} parent=1 // pred_check
      _
    $region23: #{simple_rnn_forward.1} parent=1 // pred_check_branch
      %44 = sbr.rel (0) target = $region25
    $region24: #{simple_rnn_forward.1} parent=1 // pred_region
      _
    $region25: #{simple_rnn_forward.1} parent=1 // pred_fallthru
      _
    // Predicated region
    $region26: #{simple_rnn_forward.1} parent=1 // pred_check
      _
    $region27: #{simple_rnn_forward.1} parent=1 // pred_check_branch
      %46 = sbr.rel (0) target = $region29
    $region28: #{simple_rnn_forward.1} parent=1 // pred_region
      %47 = dma.done [#allocation4], 1024
    $region29: #{simple_rnn_forward.1} parent=1 // pred_fallthru
      _
    // Predicated region
    $region30: #{simple_rnn_forward.1} parent=1 // pred_check
      _
    $region31: #{simple_rnn_forward.1} parent=1 // pred_check_branch
      %49 = sbr.rel (0) target = $region33
    $region32: #{simple_rnn_forward.1} parent=1 // pred_region
      %50 = dma.done [#allocation6], 1024
    $region33: #{simple_rnn_forward.1} parent=1 // pred_fallthru
      _
    %v52 = vld [vmem:[%s0] sm:$0xf]
    %v53 = vld [vmem:[%s0 + $0x4] sm:$0xf]
    %v54 = vld [vmem:[%s0 + $0x8] sm:$0xf]
    %v55 = vld [vmem:[%s0 + $0xc] sm:$0xf]
    %v56 = vld [vmem:[%s0 + $0x10] sm:$0xf]
    %v57 = vld [vmem:[%s0 + $0x14] sm:$0xf]
    %v58 = vld [vmem:[%s0 + $0x18] sm:$0xf]
    %v59 = vld [vmem:[%s0 + $0x1c] sm:$0xf]
    %v60 = vld [vmem:[%s1] sm:$0xf]
    %v61 = vld [vmem:[%s1 + $0x4] sm:$0xf]
    %v62 = vld [vmem:[%s1 + $0x8] sm:$0xf]
    %v63 = vld [vmem:[%s1 + $0xc] sm:$0xf]
    %v64 = vld [vmem:[%s1 + $0x10] sm:$0xf]
    %v65 = vld [vmem:[%s1 + $0x14] sm:$0xf]
    %v66 = vld [vmem:[%s1 + $0x18] sm:$0xf]
    %v67 = vld [vmem:[%s1 + $0x1c] sm:$0xf]
    %v68 = vld [vmem:[%s1 + $0x20] sm:$0xf]
    %v69 = vld [vmem:[%s1 + $0x24] sm:$0xf]
    %v70 = vld [vmem:[%s1 + $0x28] sm:$0xf]
    %v71 = vld [vmem:[%s1 + $0x2c] sm:$0xf]
    %v72 = vld [vmem:[%s1 + $0x30] sm:$0xf]
    %v73 = vld [vmem:[%s1 + $0x34] sm:$0xf]
    %v74 = vld [vmem:[%s1 + $0x38] sm:$0xf]
    %v75 = vld [vmem:[%s1 + $0x3c] sm:$0xf]
    %v76 = vld [vmem:[%s2] sm:$0x1]
    %v78 = vlaneseq
    %v79 = vshrl.u32 %v78, 7
    %v80 = vsub.s32 0, %v79
    %v81 = vrot.slane %v76, %v80
    %v91 = vunpack.c.l.b16 %v52
    %v92 = vunpack.c.l.b16 %v53
    %v93 = vunpack.c.l.b16 %v54
    %v94 = vunpack.c.l.b16 %v55
    %v95 = vunpack.c.l.b16 %v56
    %v96 = vunpack.c.l.b16 %v57
    %v97 = vunpack.c.l.b16 %v58
    %v98 = vunpack.c.l.b16 %v59
    %v99 = vpack.c.b16 %v92, %v91
    %v100 = vpack.c.b16 %v94, %v93
    %v101 = vpack.c.b16 %v96, %v95
    %v102 = vpack.c.b16 %v98, %v97
    %v123 = vunpack.c.l.b16 %v60
    %v124 = vunpack.c.l.b16 %v61
    %v125 = vunpack.c.l.b16 %v62
    %v126 = vunpack.c.l.b16 %v63
    %v127 = vunpack.c.l.b16 %v64
    %v128 = vunpack.c.l.b16 %v65
    %v129 = vunpack.c.l.b16 %v66
    %v130 = vunpack.c.l.b16 %v67
    %v131 = vunpack.c.l.b16 %v68
    %v132 = vunpack.c.l.b16 %v69
    %v133 = vunpack.c.l.b16 %v70
    %v134 = vunpack.c.l.b16 %v71
    %v135 = vunpack.c.l.b16 %v72
    %v136 = vunpack.c.l.b16 %v73
    %v137 = vunpack.c.l.b16 %v74
    %v138 = vunpack.c.l.b16 %v75
    %v139 = vpack.c.b16 %v124, %v123
    %v140 = vpack.c.b16 %v126, %v125
    %v141 = vpack.c.b16 %v128, %v127
    %v142 = vpack.c.b16 %v130, %v129
    %v143 = vpack.c.b16 %v132, %v131
    %v144 = vpack.c.b16 %v134, %v133
    %v145 = vpack.c.b16 %v136, %v135
    %v146 = vpack.c.b16 %v138, %v137
    %155 = vmatprep.subr.bf16.mxu0 0
    %156 = vmatpush1.bf16.msra.mxu0 %v139
    %157 = vmatprep.subr.bf16.mxu0 0
    %158 = vmatpush1.bf16.msra.mxu0 %v140
    %159 = vmatprep.subr.bf16.mxu0 0
    %160 = vmatpush1.bf16.msra.mxu0 %v141
    %161 = vmatprep.subr.bf16.mxu0 0
    %162 = vmatpush1.bf16.msra.mxu0 %v142
    %163 = vmatprep.subr.bf16.mxu0 0
    %164 = vmatpush1.bf16.msra.mxu0 %v143
    %165 = vmatprep.subr.bf16.mxu0 0
    %166 = vmatpush1.bf16.msra.mxu0 %v144
    %167 = vmatprep.subr.bf16.mxu0 0
    %168 = vmatpush1.bf16.msra.mxu0 %v145
    %169 = vmatprep.subr.bf16.mxu0 0
    %170 = vmatpush1.bf16.msra.mxu0 %v146
    %171 = vmatprep.subr.bf16.mxu0 0
    %172 = vmatpush1.bf16.msra.mxu0 0
    %173 = vmatprep.subr.bf16.mxu0 0
    %174 = vmatpush1.bf16.msra.mxu0 0
    %175 = vmatprep.subr.bf16.mxu0 0
    %176 = vmatpush1.bf16.msra.mxu0 0
    %177 = vmatprep.subr.bf16.mxu0 0
    %178 = vmatpush1.bf16.msra.mxu0 0
    %179 = vmatprep.subr.bf16.mxu0 0
    %180 = vmatpush1.bf16.msra.mxu0 0
    %181 = vmatprep.subr.bf16.mxu0 0
    %182 = vmatpush1.bf16.msra.mxu0 0
    %183 = vmatprep.subr.bf16.mxu0 0
    %184 = vmatpush1.bf16.msra.mxu0 0
    %185 = vmatprep.subr.bf16.mxu0 0
    %186 = vmatpush1.bf16.msra.mxu0 0
    %187 = vmatprep.mubr.bf16.mxu0 0
    %188 = vmatmul.mubr.bf16.gmra.mrb[0].mxu0 %v99
    %v189 = vpop.f32.mrb[0].mxu0
    %v190 = vadd.f32 %v81, %v189
    %v191 = vpop.f32.mrb[0].mxu0
    %v192 = vpop.f32.mrb[0].mxu0
    %v193 = vadd.f32 %v81, %v192
    %v194 = vpop.f32.mrb[0].mxu0
    %195 = vmatprep.mubr.bf16.mxu0 0
    %196 = vmatmul.mubr.bf16.gmra.mrb[0].mxu0 %v100
    %v197 = vpop.f32.mrb[0].mxu0
    %v198 = vadd.f32 %v81, %v197
    %v199 = vpop.f32.mrb[0].mxu0
    %v200 = vpop.f32.mrb[0].mxu0
    %v201 = vadd.f32 %v81, %v200
    %v202 = vpop.f32.mrb[0].mxu0
    %203 = vmatprep.mubr.bf16.mxu0 0
    %204 = vmatmul.mubr.bf16.gmra.mrb[0].mxu0 %v101
    %v205 = vpop.f32.mrb[0].mxu0
    %v206 = vadd.f32 %v81, %v205
    %v207 = vpop.f32.mrb[0].mxu0
    %v208 = vpop.f32.mrb[0].mxu0
    %v209 = vadd.f32 %v81, %v208
    %v210 = vpop.f32.mrb[0].mxu0
    %211 = vmatprep.mubr.bf16.mxu0 0
    %212 = vmatmul.mubr.bf16.gmra.mrb[0].mxu0 %v102
    %v213 = vpop.f32.mrb[0].mxu0
    %v214 = vadd.f32 %v81, %v213
    %v215 = vpop.f32.mrb[0].mxu0
    %v216 = vpop.f32.mrb[0].mxu0
    %v217 = vadd.f32 %v81, %v216
    %v218 = vpop.f32.mrb[0].mxu0
    %219 = vdwg.mxu0
    %220 = vst [vmem:[#allocation2] sm:$0xff] %v190
    %221 = vst [vmem:[#allocation2 + $0x8] sm:$0xff] %v193
    %222 = vst [vmem:[#allocation2 + $0x10] sm:$0xff] %v198
    %223 = vst [vmem:[#allocation2 + $0x18] sm:$0xff] %v201
    %224 = vst [vmem:[#allocation2 + $0x20] sm:$0xff] %v206
    %225 = vst [vmem:[#allocation2 + $0x28] sm:$0xff] %v209
    %226 = vst [vmem:[#allocation2 + $0x30] sm:$0xff] %v214
    %227 = vst [vmem:[#allocation2 + $0x38] sm:$0xff] %v217
    %v228 = vld [vmem:[#allocation3] sm:$0xf]
    %v229 = vld [vmem:[#allocation3 + $0x4] sm:$0xf]
    %v230 = vld [vmem:[#allocation3 + $0x8] sm:$0xf]
    %v231 = vld [vmem:[#allocation3 + $0xc] sm:$0xf]
    %v232 = vld [vmem:[#allocation3 + $0x10] sm:$0xf]
    %v233 = vld [vmem:[#allocation3 + $0x14] sm:$0xf]
    %v234 = vld [vmem:[#allocation3 + $0x18] sm:$0xf]
    %v235 = vld [vmem:[#allocation3 + $0x1c] sm:$0xf]
    %v236 = vld [vmem:[#allocation3 + $0x20] sm:$0xf]
    %v237 = vld [vmem:[#allocation3 + $0x24] sm:$0xf]
    %v238 = vld [vmem:[#allocation3 + $0x28] sm:$0xf]
    %v239 = vld [vmem:[#allocation3 + $0x2c] sm:$0xf]
    %v240 = vld [vmem:[#allocation3 + $0x30] sm:$0xf]
    %v241 = vld [vmem:[#allocation3 + $0x34] sm:$0xf]
    %v242 = vld [vmem:[#allocation3 + $0x38] sm:$0xf]
    %v243 = vld [vmem:[#allocation3 + $0x3c] sm:$0xf]
    %v244 = vld [vmem:[#allocation2] sm:$0xff]
    %v261 = vunpack.c.l.b16 %v228
    %v262 = vunpack.c.l.b16 %v229
    %v263 = vunpack.c.l.b16 %v230
    %v264 = vunpack.c.l.b16 %v231
    %v265 = vunpack.c.l.b16 %v232
    %v266 = vunpack.c.l.b16 %v233
    %v267 = vunpack.c.l.b16 %v234
    %v268 = vunpack.c.l.b16 %v235
    %v269 = vunpack.c.l.b16 %v236
    %v270 = vunpack.c.l.b16 %v237
    %v271 = vunpack.c.l.b16 %v238
    %v272 = vunpack.c.l.b16 %v239
    %v273 = vunpack.c.l.b16 %v240
    %v274 = vunpack.c.l.b16 %v241
    %v275 = vunpack.c.l.b16 %v242
    %v276 = vunpack.c.l.b16 %v243
    %v277 = vpack.c.b16 %v262, %v261
    %v278 = vpack.c.b16 %v264, %v263
    %v279 = vpack.c.b16 %v266, %v265
    %v280 = vpack.c.b16 %v268, %v267
    %v281 = vpack.c.b16 %v270, %v269
    %v282 = vpack.c.b16 %v272, %v271
    %v283 = vpack.c.b16 %v274, %v273
    %v284 = vpack.c.b16 %v276, %v275
    %293 = vmatprep.subr.bf16.mxu0 0
    %294 = vmatpush1.bf16.msra.mxu0 %v277
    %295 = vmatprep.subr.bf16.mxu0 0
    %296 = vmatpush1.bf16.msra.mxu0 %v278
    %297 = vmatprep.subr.bf16.mxu0 0
    %298 = vmatpush1.bf16.msra.mxu0 %v279
    %299 = vmatprep.subr.bf16.mxu0 0
    %300 = vmatpush1.bf16.msra.mxu0 %v280
    %301 = vmatprep.subr.bf16.mxu0 0
    %302 = vmatpush1.bf16.msra.mxu0 %v281
    %303 = vmatprep.subr.bf16.mxu0 0
    %304 = vmatpush1.bf16.msra.mxu0 %v282
    %305 = vmatprep.subr.bf16.mxu0 0
    %306 = vmatpush1.bf16.msra.mxu0 %v283
    %307 = vmatprep.subr.bf16.mxu0 0
    %308 = vmatpush1.bf16.msra.mxu0 %v284
    %309 = vmatprep.subr.bf16.mxu0 0
    %310 = vmatpush1.bf16.msra.mxu0 0
    %311 = vmatprep.subr.bf16.mxu0 0
    %312 = vmatpush1.bf16.msra.mxu0 0
    %313 = vmatprep.subr.bf16.mxu0 0
    %314 = vmatpush1.bf16.msra.mxu0 0
    %315 = vmatprep.subr.bf16.mxu0 0
    %316 = vmatpush1.bf16.msra.mxu0 0
    %317 = vmatprep.subr.bf16.mxu0 0
    %318 = vmatpush1.bf16.msra.mxu0 0
    %319 = vmatprep.subr.bf16.mxu0 0
    %320 = vmatpush1.bf16.msra.mxu0 0
    %321 = vmatprep.subr.bf16.mxu0 0
    %322 = vmatpush1.bf16.msra.mxu0 0
    %323 = vmatprep.subr.bf16.mxu0 0
    %324 = vmatpush1.bf16.msra.mxu0 0
    %325 = vmatprep.mubr.bf16.mxu0 0
    %326 = vmatmul.mubr.bf16.gmra.mrb[0].mxu0 0
    %v327 = vpop.f32.mrb[0].mxu0
    %v328 = vadd.f32 0.0, %v327
    %v329 = vpop.f32.mrb[0].mxu0
    %v330 = vpop.f32.mrb[0].mxu0
    %v331 = vpop.f32.mrb[0].mxu0
    %332 = vdwg.mxu0
    %v333 = vadd.f32 %v244, %v328
    %v334 = vtanh.pop %v333
    %s335 = scalar_lea.vmem [#allocation2], 8
    %v336 = vld [vmem:[%s335] sm:$0xff]
    %v337 = vpack.c.bf16 %v334, %v334
    %338 = vmatprep.subr.bf16.mxu0 0
    %339 = vmatpush1.bf16.msra.mxu0 %v277
    %340 = vmatprep.subr.bf16.mxu0 0
    %341 = vmatpush1.bf16.msra.mxu0 %v278
    %342 = vmatprep.subr.bf16.mxu0 0
    %343 = vmatpush1.bf16.msra.mxu0 %v279
    %344 = vmatprep.subr.bf16.mxu0 0
    %345 = vmatpush1.bf16.msra.mxu0 %v280
    %346 = vmatprep.subr.bf16.mxu0 0
    %347 = vmatpush1.bf16.msra.mxu0 %v281
    %348 = vmatprep.subr.bf16.mxu0 0
    %349 = vmatpush1.bf16.msra.mxu0 %v282
    %350 = vmatprep.subr.bf16.mxu0 0
    %351 = vmatpush1.bf16.msra.mxu0 %v283
    %352 = vmatprep.subr.bf16.mxu0 0
    %353 = vmatpush1.bf16.msra.mxu0 %v284
    %354 = vmatprep.subr.bf16.mxu0 0
    %355 = vmatpush1.bf16.msra.mxu0 0
    %356 = vmatprep.subr.bf16.mxu0 0
    %357 = vmatpush1.bf16.msra.mxu0 0
    %358 = vmatprep.subr.bf16.mxu0 0
    %359 = vmatpush1.bf16.msra.mxu0 0
    %360 = vmatprep.subr.bf16.mxu0 0
    %361 = vmatpush1.bf16.msra.mxu0 0
    %362 = vmatprep.subr.bf16.mxu0 0
    %363 = vmatpush1.bf16.msra.mxu0 0
    %364 = vmatprep.subr.bf16.mxu0 0
    %365 = vmatpush1.bf16.msra.mxu0 0
    %366 = vmatprep.subr.bf16.mxu0 0
    %367 = vmatpush1.bf16.msra.mxu0 0
    %368 = vmatprep.subr.bf16.mxu0 0
    %369 = vmatpush1.bf16.msra.mxu0 0
    %370 = vmatprep.mubr.bf16.mxu0 0
    %371 = vmatmul.mubr.bf16.gmra.mrb[0].mxu0 %v337
    %v372 = vpop.f32.mrb[0].mxu0
    %v373 = vadd.f32 0.0, %v372
    %v374 = vpop.f32.mrb[0].mxu0
    %v375 = vpop.f32.mrb[0].mxu0
    %v376 = vpop.f32.mrb[0].mxu0
    %377 = vdwg.mxu0
    %v378 = vadd.f32 %v336, %v373
    %v379 = vtanh.pop %v378
    %s380 = scalar_lea.vmem [#allocation2], 16
    %v381 = vld [vmem:[%s380] sm:$0xff]
    %v382 = vpack.c.bf16 %v379, %v379
    %383 = vmatprep.subr.bf16.mxu0 0
    %384 = vmatpush1.bf16.msra.mxu0 %v277
    %385 = vmatprep.subr.bf16.mxu0 0
    %386 = vmatpush1.bf16.msra.mxu0 %v278
    %387 = vmatprep.subr.bf16.mxu0 0
    %388 = vmatpush1.bf16.msra.mxu0 %v279
    %389 = vmatprep.subr.bf16.mxu0 0
    %390 = vmatpush1.bf16.msra.mxu0 %v280
    %391 = vmatprep.subr.bf16.mxu0 0
    %392 = vmatpush1.bf16.msra.mxu0 %v281
    %393 = vmatprep.subr.bf16.mxu0 0
    %394 = vmatpush1.bf16.msra.mxu0 %v282
    %395 = vmatprep.subr.bf16.mxu0 0
    %396 = vmatpush1.bf16.msra.mxu0 %v283
    %397 = vmatprep.subr.bf16.mxu0 0
    %398 = vmatpush1.bf16.msra.mxu0 %v284
    %399 = vmatprep.subr.bf16.mxu0 0
    %400 = vmatpush1.bf16.msra.mxu0 0
    %401 = vmatprep.subr.bf16.mxu0 0
    %402 = vmatpush1.bf16.msra.mxu0 0
    %403 = vmatprep.subr.bf16.mxu0 0
    %404 = vmatpush1.bf16.msra.mxu0 0
    %405 = vmatprep.subr.bf16.mxu0 0
    %406 = vmatpush1.bf16.msra.mxu0 0
    %407 = vmatprep.subr.bf16.mxu0 0
    %408 = vmatpush1.bf16.msra.mxu0 0
    %409 = vmatprep.subr.bf16.mxu0 0
    %410 = vmatpush1.bf16.msra.mxu0 0
    %411 = vmatprep.subr.bf16.mxu0 0
    %412 = vmatpush1.bf16.msra.mxu0 0
    %413 = vmatprep.subr.bf16.mxu0 0
    %414 = vmatpush1.bf16.msra.mxu0 0
    %415 = vmatprep.mubr.bf16.mxu0 0
    %416 = vmatmul.mubr.bf16.gmra.mrb[0].mxu0 %v382
    %v417 = vpop.f32.mrb[0].mxu0
    %v418 = vadd.f32 0.0, %v417
    %v419 = vpop.f32.mrb[0].mxu0
    %v420 = vpop.f32.mrb[0].mxu0
    %v421 = vpop.f32.mrb[0].mxu0
    %422 = vdwg.mxu0
    %v423 = vadd.f32 %v381, %v418
    %v424 = vtanh.pop %v423
    %s425 = scalar_lea.vmem [#allocation2], 24
    %v426 = vld [vmem:[%s425] sm:$0xff]
    %v427 = vpack.c.bf16 %v424, %v424
    %428 = vmatprep.subr.bf16.mxu0 0
    %429 = vmatpush1.bf16.msra.mxu0 %v277
    %430 = vmatprep.subr.bf16.mxu0 0
    %431 = vmatpush1.bf16.msra.mxu0 %v278
    %432 = vmatprep.subr.bf16.mxu0 0
    %433 = vmatpush1.bf16.msra.mxu0 %v279
    %434 = vmatprep.subr.bf16.mxu0 0
    %435 = vmatpush1.bf16.msra.mxu0 %v280
    %436 = vmatprep.subr.bf16.mxu0 0
    %437 = vmatpush1.bf16.msra.mxu0 %v281
    %438 = vmatprep.subr.bf16.mxu0 0
    %439 = vmatpush1.bf16.msra.mxu0 %v282
    %440 = vmatprep.subr.bf16.mxu0 0
    %441 = vmatpush1.bf16.msra.mxu0 %v283
    %442 = vmatprep.subr.bf16.mxu0 0
    %443 = vmatpush1.bf16.msra.mxu0 %v284
    %444 = vmatprep.subr.bf16.mxu0 0
    %445 = vmatpush1.bf16.msra.mxu0 0
    %446 = vmatprep.subr.bf16.mxu0 0
    %447 = vmatpush1.bf16.msra.mxu0 0
    %448 = vmatprep.subr.bf16.mxu0 0
    %449 = vmatpush1.bf16.msra.mxu0 0
    %450 = vmatprep.subr.bf16.mxu0 0
    %451 = vmatpush1.bf16.msra.mxu0 0
    %452 = vmatprep.subr.bf16.mxu0 0
    %453 = vmatpush1.bf16.msra.mxu0 0
    %454 = vmatprep.subr.bf16.mxu0 0
    %455 = vmatpush1.bf16.msra.mxu0 0
    %456 = vmatprep.subr.bf16.mxu0 0
    %457 = vmatpush1.bf16.msra.mxu0 0
    %458 = vmatprep.subr.bf16.mxu0 0
    %459 = vmatpush1.bf16.msra.mxu0 0
    %460 = vmatprep.mubr.bf16.mxu0 0
    %461 = vmatmul.mubr.bf16.gmra.mrb[0].mxu0 %v427
    %v462 = vpop.f32.mrb[0].mxu0
    %v463 = vadd.f32 0.0, %v462
    %v464 = vpop.f32.mrb[0].mxu0
    %v465 = vpop.f32.mrb[0].mxu0
    %v466 = vpop.f32.mrb[0].mxu0
    %467 = vdwg.mxu0
    %v468 = vadd.f32 %v426, %v463
    %v469 = vtanh.pop %v468
    %s470 = scalar_lea.vmem [#allocation2], 32
    %v471 = vld [vmem:[%s470] sm:$0xff]
    %v472 = vpack.c.bf16 %v469, %v469
    %473 = vmatprep.subr.bf16.mxu0 0
    %474 = vmatpush1.bf16.msra.mxu0 %v277
    %475 = vmatprep.subr.bf16.mxu0 0
    %476 = vmatpush1.bf16.msra.mxu0 %v278
    %477 = vmatprep.subr.bf16.mxu0 0
    %478 = vmatpush1.bf16.msra.mxu0 %v279
    %479 = vmatprep.subr.bf16.mxu0 0
    %480 = vmatpush1.bf16.msra.mxu0 %v280
    %481 = vmatprep.subr.bf16.mxu0 0
    %482 = vmatpush1.bf16.msra.mxu0 %v281
    %483 = vmatprep.subr.bf16.mxu0 0
    %484 = vmatpush1.bf16.msra.mxu0 %v282
    %485 = vmatprep.subr.bf16.mxu0 0
    %486 = vmatpush1.bf16.msra.mxu0 %v283
    %487 = vmatprep.subr.bf16.mxu0 0
    %488 = vmatpush1.bf16.msra.mxu0 %v284
    %489 = vmatprep.subr.bf16.mxu0 0
    %490 = vmatpush1.bf16.msra.mxu0 0
    %491 = vmatprep.subr.bf16.mxu0 0
    %492 = vmatpush1.bf16.msra.mxu0 0
    %493 = vmatprep.subr.bf16.mxu0 0
    %494 = vmatpush1.bf16.msra.mxu0 0
    %495 = vmatprep.subr.bf16.mxu0 0
    %496 = vmatpush1.bf16.msra.mxu0 0
    %497 = vmatprep.subr.bf16.mxu0 0
    %498 = vmatpush1.bf16.msra.mxu0 0
    %499 = vmatprep.subr.bf16.mxu0 0
    %500 = vmatpush1.bf16.msra.mxu0 0
    %501 = vmatprep.subr.bf16.mxu0 0
    %502 = vmatpush1.bf16.msra.mxu0 0
    %503 = vmatprep.subr.bf16.mxu0 0
    %504 = vmatpush1.bf16.msra.mxu0 0
    %505 = vmatprep.mubr.bf16.mxu0 0
    %506 = vmatmul.mubr.bf16.gmra.mrb[0].mxu0 %v472
    %v507 = vpop.f32.mrb[0].mxu0
    %v508 = vadd.f32 0.0, %v507
    %v509 = vpop.f32.mrb[0].mxu0
    %v510 = vpop.f32.mrb[0].mxu0
    %v511 = vpop.f32.mrb[0].mxu0
    %512 = vdwg.mxu0
    %v513 = vadd.f32 %v471, %v508
    %v514 = vtanh.pop %v513
    %s515 = scalar_lea.vmem [#allocation2], 40
    %v516 = vld [vmem:[%s515] sm:$0xff]
    %v517 = vpack.c.bf16 %v514, %v514
    %518 = vmatprep.subr.bf16.mxu0 0
    %519 = vmatpush1.bf16.msra.mxu0 %v277
    %520 = vmatprep.subr.bf16.mxu0 0
    %521 = vmatpush1.bf16.msra.mxu0 %v278
    %522 = vmatprep.subr.bf16.mxu0 0
    %523 = vmatpush1.bf16.msra.mxu0 %v279
    %524 = vmatprep.subr.bf16.mxu0 0
    %525 = vmatpush1.bf16.msra.mxu0 %v280
    %526 = vmatprep.subr.bf16.mxu0 0
    %527 = vmatpush1.bf16.msra.mxu0 %v281
    %528 = vmatprep.subr.bf16.mxu0 0
    %529 = vmatpush1.bf16.msra.mxu0 %v282
    %530 = vmatprep.subr.bf16.mxu0 0
    %531 = vmatpush1.bf16.msra.mxu0 %v283
    %532 = vmatprep.subr.bf16.mxu0 0
    %533 = vmatpush1.bf16.msra.mxu0 %v284
    %534 = vmatprep.subr.bf16.mxu0 0
    %535 = vmatpush1.bf16.msra.mxu0 0
    %536 = vmatprep.subr.bf16.mxu0 0
    %537 = vmatpush1.bf16.msra.mxu0 0
    %538 = vmatprep.subr.bf16.mxu0 0
    %539 = vmatpush1.bf16.msra.mxu0 0
    %540 = vmatprep.subr.bf16.mxu0 0
    %541 = vmatpush1.bf16.msra.mxu0 0
    %542 = vmatprep.subr.bf16.mxu0 0
    %543 = vmatpush1.bf16.msra.mxu0 0
    %544 = vmatprep.subr.bf16.mxu0 0
    %545 = vmatpush1.bf16.msra.mxu0 0
    %546 = vmatprep.subr.bf16.mxu0 0
    %547 = vmatpush1.bf16.msra.mxu0 0
    %548 = vmatprep.subr.bf16.mxu0 0
    %549 = vmatpush1.bf16.msra.mxu0 0
    %550 = vmatprep.mubr.bf16.mxu0 0
    %551 = vmatmul.mubr.bf16.gmra.mrb[0].mxu0 %v517
    %v552 = vpop.f32.mrb[0].mxu0
    %v553 = vadd.f32 0.0, %v552
    %v554 = vpop.f32.mrb[0].mxu0
    %v555 = vpop.f32.mrb[0].mxu0
    %v556 = vpop.f32.mrb[0].mxu0
    %557 = vdwg.mxu0
    %v558 = vadd.f32 %v516, %v553
    %v559 = vtanh.pop %v558
    %s560 = scalar_lea.vmem [#allocation2], 48
    %v561 = vld [vmem:[%s560] sm:$0xff]
    %v562 = vpack.c.bf16 %v559, %v559
    %563 = vmatprep.subr.bf16.mxu0 0
    %564 = vmatpush1.bf16.msra.mxu0 %v277
    %565 = vmatprep.subr.bf16.mxu0 0
    %566 = vmatpush1.bf16.msra.mxu0 %v278
    %567 = vmatprep.subr.bf16.mxu0 0
    %568 = vmatpush1.bf16.msra.mxu0 %v279
    %569 = vmatprep.subr.bf16.mxu0 0
    %570 = vmatpush1.bf16.msra.mxu0 %v280
    %571 = vmatprep.subr.bf16.mxu0 0
    %572 = vmatpush1.bf16.msra.mxu0 %v281
    %573 = vmatprep.subr.bf16.mxu0 0
    %574 = vmatpush1.bf16.msra.mxu0 %v282
    %575 = vmatprep.subr.bf16.mxu0 0
    %576 = vmatpush1.bf16.msra.mxu0 %v283
    %577 = vmatprep.subr.bf16.mxu0 0
    %578 = vmatpush1.bf16.msra.mxu0 %v284
    %579 = vmatprep.subr.bf16.mxu0 0
    %580 = vmatpush1.bf16.msra.mxu0 0
    %581 = vmatprep.subr.bf16.mxu0 0
    %582 = vmatpush1.bf16.msra.mxu0 0
    %583 = vmatprep.subr.bf16.mxu0 0
    %584 = vmatpush1.bf16.msra.mxu0 0
    %585 = vmatprep.subr.bf16.mxu0 0
    %586 = vmatpush1.bf16.msra.mxu0 0
    %587 = vmatprep.subr.bf16.mxu0 0
    %588 = vmatpush1.bf16.msra.mxu0 0
    %589 = vmatprep.subr.bf16.mxu0 0
    %590 = vmatpush1.bf16.msra.mxu0 0
    %591 = vmatprep.subr.bf16.mxu0 0
    %592 = vmatpush1.bf16.msra.mxu0 0
    %593 = vmatprep.subr.bf16.mxu0 0
    %594 = vmatpush1.bf16.msra.mxu0 0
    %595 = vmatprep.mubr.bf16.mxu0 0
    %596 = vmatmul.mubr.bf16.gmra.mrb[0].mxu0 %v562
    %v597 = vpop.f32.mrb[0].mxu0
    %v598 = vadd.f32 0.0, %v597
    %v599 = vpop.f32.mrb[0].mxu0
    %v600 = vpop.f32.mrb[0].mxu0
    %v601 = vpop.f32.mrb[0].mxu0
    %602 = vdwg.mxu0
    %v603 = vadd.f32 %v561, %v598
    %v604 = vtanh.pop %v603
    %s605 = scalar_lea.vmem [#allocation2], 56
    %v606 = vld [vmem:[%s605] sm:$0xff]
    %v607 = vpack.c.bf16 %v604, %v604
    %608 = vmatprep.subr.bf16.mxu0 0
    %609 = vmatpush1.bf16.msra.mxu0 %v277
    %610 = vmatprep.subr.bf16.mxu0 0
    %611 = vmatpush1.bf16.msra.mxu0 %v278
    %612 = vmatprep.subr.bf16.mxu0 0
    %613 = vmatpush1.bf16.msra.mxu0 %v279
    %614 = vmatprep.subr.bf16.mxu0 0
    %615 = vmatpush1.bf16.msra.mxu0 %v280
    %616 = vmatprep.subr.bf16.mxu0 0
    %617 = vmatpush1.bf16.msra.mxu0 %v281
    %618 = vmatprep.subr.bf16.mxu0 0
    %619 = vmatpush1.bf16.msra.mxu0 %v282
    %620 = vmatprep.subr.bf16.mxu0 0
    %621 = vmatpush1.bf16.msra.mxu0 %v283
    %622 = vmatprep.subr.bf16.mxu0 0
    %623 = vmatpush1.bf16.msra.mxu0 %v284
    %624 = vmatprep.subr.bf16.mxu0 0
    %625 = vmatpush1.bf16.msra.mxu0 0
    %626 = vmatprep.subr.bf16.mxu0 0
    %627 = vmatpush1.bf16.msra.mxu0 0
    %628 = vmatprep.subr.bf16.mxu0 0
    %629 = vmatpush1.bf16.msra.mxu0 0
    %630 = vmatprep.subr.bf16.mxu0 0
    %631 = vmatpush1.bf16.msra.mxu0 0
    %632 = vmatprep.subr.bf16.mxu0 0
    %633 = vmatpush1.bf16.msra.mxu0 0
    %634 = vmatprep.subr.bf16.mxu0 0
    %635 = vmatpush1.bf16.msra.mxu0 0
    %636 = vmatprep.subr.bf16.mxu0 0
    %637 = vmatpush1.bf16.msra.mxu0 0
    %638 = vmatprep.subr.bf16.mxu0 0
    %639 = vmatpush1.bf16.msra.mxu0 0
    %640 = vmatprep.mubr.bf16.mxu0 0
    %641 = vmatmul.mubr.bf16.gmra.mrb[0].mxu0 %v607
    %v642 = vpop.f32.mrb[0].mxu0
    %v643 = vadd.f32 0.0, %v642
    %v644 = vpop.f32.mrb[0].mxu0
    %v645 = vpop.f32.mrb[0].mxu0
    %v646 = vpop.f32.mrb[0].mxu0
    %647 = vdwg.mxu0
    %v648 = vadd.f32 %v606, %v643
    %v649 = vtanh.pop %v648
    %v650 = vpack.c.bf16 %v649, %v649
    %v651 = vld [vmem:[#allocation5] sm:$0xf]
    %v652 = vld [vmem:[#allocation5 + $0x4] sm:$0xf]
    %v653 = vld [vmem:[#allocation5 + $0x8] sm:$0xf]
    %v654 = vld [vmem:[#allocation5 + $0xc] sm:$0xf]
    %v655 = vld [vmem:[#allocation5 + $0x10] sm:$0xf]
    %v656 = vld [vmem:[#allocation5 + $0x14] sm:$0xf]
    %v657 = vld [vmem:[#allocation5 + $0x18] sm:$0xf]
    %v658 = vld [vmem:[#allocation5 + $0x1c] sm:$0xf]
    %v659 = vld [vmem:[#allocation5 + $0x20] sm:$0xf]
    %v660 = vld [vmem:[#allocation5 + $0x24] sm:$0xf]
    %v661 = vld [vmem:[#allocation5 + $0x28] sm:$0xf]
    %v662 = vld [vmem:[#allocation5 + $0x2c] sm:$0xf]
    %v663 = vld [vmem:[#allocation5 + $0x30] sm:$0xf]
    %v664 = vld [vmem:[#allocation5 + $0x34] sm:$0xf]
    %v665 = vld [vmem:[#allocation5 + $0x38] sm:$0xf]
    %v666 = vld [vmem:[#allocation5 + $0x3c] sm:$0xf]
    %v667 = vld [vmem:[%s5] sm:$0x1]
    %v669 = vlaneseq
    %v670 = vshrl.u32 %v669, 7
    %v671 = vsub.s32 0, %v670
    %v672 = vrot.slane %v667, %v671
    %v690 = vunpack.c.l.b16 %v651
    %v691 = vunpack.c.l.b16 %v652
    %v692 = vunpack.c.l.b16 %v653
    %v693 = vunpack.c.l.b16 %v654
    %v694 = vunpack.c.l.b16 %v655
    %v695 = vunpack.c.l.b16 %v656
    %v696 = vunpack.c.l.b16 %v657
    %v697 = vunpack.c.l.b16 %v658
    %v698 = vunpack.c.l.b16 %v659
    %v699 = vunpack.c.l.b16 %v660
    %v700 = vunpack.c.l.b16 %v661
    %v701 = vunpack.c.l.b16 %v662
    %v702 = vunpack.c.l.b16 %v663
    %v703 = vunpack.c.l.b16 %v664
    %v704 = vunpack.c.l.b16 %v665
    %v705 = vunpack.c.l.b16 %v666
    %v706 = vpack.c.b16 %v691, %v690
    %v707 = vpack.c.b16 %v693, %v692
    %v708 = vpack.c.b16 %v695, %v694
    %v709 = vpack.c.b16 %v697, %v696
    %v710 = vpack.c.b16 %v699, %v698
    %v711 = vpack.c.b16 %v701, %v700
    %v712 = vpack.c.b16 %v703, %v702
    %v713 = vpack.c.b16 %v705, %v704
    %722 = vmatprep.subr.bf16.mxu0 0
    %723 = vmatpush1.bf16.msra.mxu0 %v706
    %724 = vmatprep.subr.bf16.mxu0 0
    %725 = vmatpush1.bf16.msra.mxu0 %v707
    %726 = vmatprep.subr.bf16.mxu0 0
    %727 = vmatpush1.bf16.msra.mxu0 %v708
    %728 = vmatprep.subr.bf16.mxu0 0
    %729 = vmatpush1.bf16.msra.mxu0 %v709
    %730 = vmatprep.subr.bf16.mxu0 0
    %731 = vmatpush1.bf16.msra.mxu0 %v710
    %732 = vmatprep.subr.bf16.mxu0 0
    %733 = vmatpush1.bf16.msra.mxu0 %v711
    %734 = vmatprep.subr.bf16.mxu0 0
    %735 = vmatpush1.bf16.msra.mxu0 %v712
    %736 = vmatprep.subr.bf16.mxu0 0
    %737 = vmatpush1.bf16.msra.mxu0 %v713
    %738 = vmatprep.subr.bf16.mxu0 0
    %739 = vmatpush1.bf16.msra.mxu0 0
    %740 = vmatprep.subr.bf16.mxu0 0
    %741 = vmatpush1.bf16.msra.mxu0 0
    %742 = vmatprep.subr.bf16.mxu0 0
    %743 = vmatpush1.bf16.msra.mxu0 0
    %744 = vmatprep.subr.bf16.mxu0 0
    %745 = vmatpush1.bf16.msra.mxu0 0
    %746 = vmatprep.subr.bf16.mxu0 0
    %747 = vmatpush1.bf16.msra.mxu0 0
    %748 = vmatprep.subr.bf16.mxu0 0
    %749 = vmatpush1.bf16.msra.mxu0 0
    %750 = vmatprep.subr.bf16.mxu0 0
    %751 = vmatpush1.bf16.msra.mxu0 0
    %752 = vmatprep.subr.bf16.mxu0 0
    %753 = vmatpush1.bf16.msra.mxu0 0
    %754 = vmatprep.mubr.bf16.mxu0 0
    %755 = vmatmul.mubr.bf16.gmra.mrb[0].mxu0 %v650
    %v756 = vpop.f32.mrb[0].mxu0
    %v757 = vadd.f32 %v672, %v756
    %v758 = vpop.f32.mrb[0].mxu0
    %v759 = vpop.f32.mrb[0].mxu0
    %v760 = vpop.f32.mrb[0].mxu0
    %761 = vdwg.mxu0
    %762 = vst [vmem:[%s6] sm:$0xff] %v757
    // Predicated region
    $region34: #{simple_rnn_forward.1} parent=1 // pred_check
      _
    $region35: #{simple_rnn_forward.1} parent=1 // pred_check_branch
      %764 = sbr.rel (0) target = $region37
    $region36: #{simple_rnn_forward.1} parent=1 // pred_region
      _
    $region37: #{simple_rnn_forward.1} parent=1 // pred_fallthru
      _
    // Predicated region
    $region38: #{simple_rnn_forward.1} parent=1 // pred_check
      _
    $region39: #{simple_rnn_forward.1} parent=1 // pred_check_branch
      %766 = sbr.rel (0) target = $region41
    $region40: #{simple_rnn_forward.1} parent=1 // pred_region
      _
    $region41: #{simple_rnn_forward.1} parent=1 // pred_fallthru
      _
    %767 = vsyncpa [#allocation4], 1
    %768 = vsyncpa [#allocation6], 1

</llo_original>
